<compile_context>
chip_gen: v7x
topology: tpu7x:2x2x1
jax: 0.10.0
libtpu: 0.0.40
codegen_flags: <defaults>
</compile_context>

<pallas_src>
import functools
import numpy as np
import jax
import jax.numpy as jnp
from jax import lax
from jax.experimental import pallas as pl
from jax.experimental.pallas import tpu as pltpu


def generate_edge_indices(w, h):
    edge_idx = []
    dim = (w, h)
    for i in range(w):
        for j in range(h):
            u = np.ravel_multi_index((i, j), dims=dim)
            if i + 1 < w:
                edge_idx.append((u, np.ravel_multi_index((i + 1, j), dims=dim)))
            if j + 1 < h:
                edge_idx.append((u, np.ravel_multi_index((i, j + 1), dims=dim)))
    return np.array(edge_idx, dtype=np.int32)


def _structsvm_kernel(w_ref, x_ref, b_ref, out_ref):
    # (3C, F) . (P, F) contracted on F -> (3C, P).  Output last dim P = 256 is
    # lane-dense (multiple of 128) -> unmasked full-lane stores.
    pots = lax.dot_general(
        w_ref[...], x_ref[...],
        dimension_numbers=(((1,), (1,)), ((), ())),   # contract both on F
        precision=lax.Precision.HIGHEST,              # fp32 MXU contraction
        preferred_element_type=jnp.float32)
    # Exact f32 bias add; (3C, 1) broadcasts over the P lanes on the idle VPU.
    out_ref[...] = pots + b_ref[...]


def structsvm_forward(image, edges, pixel_w, pixel_b, edge_w, edge_b,
                      n_feat, n_classes, w, h):
    """image: (w, h, n_feat) float32.  Returns (pixel_pots, edge_pots)."""
    P = w * h
    C = n_classes
    F = n_feat

    # ---- glue (tiny, XLA-fused under jit): no transpose, no padding --------
    x = image.reshape(P, F)                                        # (P, F)
    # Stacked weight rows: [0:C) pixel, [C:2C) edge-u, [2C:3C) edge-v.
    w_all = jnp.concatenate([pixel_w, edge_w[:, :F], edge_w[:, F:]],
                            axis=0)                                # (3C, F)
    # Matching biases (edge bias counted once, on the edge-u block).
    b_all = jnp.concatenate([pixel_b, edge_b,
                             jnp.zeros_like(edge_b)]).reshape(3 * C, 1)

    vmem = pl.BlockSpec(memory_space=pltpu.MemorySpace.VMEM)
    pots_t = pl.pallas_call(
        _structsvm_kernel,
        out_shape=jax.ShapeDtypeStruct((3 * C, P), jnp.float32),
        in_specs=[vmem, vmem, vmem],
        out_specs=vmem,
    )(w_all, x, b_all)

    # Split + undo the transpose (tiny XLA ops).
    pix_t = pots_t[:C]             # (C, P) = Wp   @ x^T + bp
    eu_t = pots_t[C:2 * C]         # (C, P) = We_u @ x^T + be
    ev_t = pots_t[2 * C:]          # (C, P) = We_v @ x^T

    pixel_pots = pix_t.T                                           # (P, C)
    # (C, P) -> (E, C) gather-add in XLA; exact by linearity of the layer.
    e0 = jnp.asarray(edges[:, 0])
    e1 = jnp.asarray(edges[:, 1])
    edge_pots = (eu_t[:, e0] + ev_t[:, e1]).T                      # (E, C)
    return pixel_pots, edge_pots


if __name__ == "__main__":
    # Small shapes consistent with the module.
    n_feat, n_classes, w, h = 32, 8, 16, 16
    P = w * h
    edges = generate_edge_indices(w, h)
    assert edges.shape == (2 * (w - 1) * (h - 1) + (w - 1) + (h - 1), 2)

    key = jax.random.PRNGKey(0)
    k_img, k_pw, k_pb, k_ew, k_eb = jax.random.split(key, 5)

    # Deterministic parameter init (PyTorch-Linear-style uniform bounds).
    bound_p = 1.0 / np.sqrt(n_feat)
    bound_e = 1.0 / np.sqrt(2 * n_feat)
    pixel_w = jax.random.uniform(k_pw, (n_classes, n_feat),
                                 minval=-bound_p, maxval=bound_p,
                                 dtype=jnp.float32)
    pixel_b = jax.random.uniform(k_pb, (n_classes,),
                                 minval=-bound_p, maxval=bound_p,
                                 dtype=jnp.float32)
    edge_w = jax.random.uniform(k_ew, (n_classes, 2 * n_feat),
                                minval=-bound_e, maxval=bound_e,
                                dtype=jnp.float32)
    edge_b = jax.random.uniform(k_eb, (n_classes,),
                                minval=-bound_e, maxval=bound_e,
                                dtype=jnp.float32)

    image = jax.random.normal(k_img, (w, h, n_feat), dtype=jnp.float32)

    fwd = jax.jit(functools.partial(
        structsvm_forward, edges=edges,
        pixel_w=pixel_w, pixel_b=pixel_b, edge_w=edge_w, edge_b=edge_b,
        n_feat=n_feat, n_classes=n_classes, w=w, h=h))

    pixel_pots, edge_pots = fwd(image)
    jax.block_until_ready((pixel_pots, edge_pots))

    assert pixel_pots.shape == (P, n_classes)
    assert edge_pots.shape == (len(edges), n_classes)

    # Pure-JAX f32 reference (HIGHEST matmul precision on both sides, so the
    # check can be tight now that everything stays in f32).
    x = image.reshape(P, n_feat)
    ref_pix = jnp.dot(x, pixel_w.T, precision=lax.Precision.HIGHEST) + pixel_b
    ef = jnp.concatenate([x[edges[:, 0]], x[edges[:, 1]]], axis=1)
    ref_edge = jnp.dot(ef, edge_w.T, precision=lax.Precision.HIGHEST) + edge_b
    np.testing.assert_allclose(np.asarray(pixel_pots), np.asarray(ref_pix),
                               rtol=1e-5, atol=1e-5)
    np.testing.assert_allclose(np.asarray(edge_pots), np.asarray(ref_edge),
                               rtol=1e-5, atol=1e-5)

    # TODO(synk): predict() (OR-Tools LP) and score() are host-side / solver
    # code with no Pallas equivalent; only forward() is implemented here.
    print("KERNEL_OK")
</pallas_src>

<mosaic_0001>
module attributes {stable_mosaic.version = 11 : i64} {
  func.func @_structsvm_kernel(%arg0: memref<24x32xf32, #tpu.memory_space<vmem>>, %arg1: memref<256x32xf32, #tpu.memory_space<vmem>>, %arg2: memref<24x1xf32, #tpu.memory_space<vmem>>, %arg3: memref<24x256xf32, #tpu.memory_space<vmem>>) attributes {dimension_semantics = [], scalar_prefetch = 0 : i64, scratch_operands = 0 : i64, tpu.core_type = #tpu.core_type<tc>} {
    %c0 = arith.constant 0 : index
    %c0_0 = arith.constant 0 : index
    %0 = vector.load %arg0[%c0, %c0_0] : memref<24x32xf32, #tpu.memory_space<vmem>>, vector<24x32xf32>
    %c0_1 = arith.constant 0 : index
    %c0_2 = arith.constant 0 : index
    %1 = vector.load %arg1[%c0_1, %c0_2] : memref<256x32xf32, #tpu.memory_space<vmem>>, vector<256x32xf32>
    %cst = arith.constant dense<0.000000e+00> : vector<24x256xf32>
    %2 = tpu.matmul %0, %1, %cst {dimension_numbers = #tpu.dot_dimension_numbers<[1], [1], [0], [0], [0, 0, 1, 0], [], []>, precision = #tpu.contract_precision<fp32>} : vector<24x32xf32>, vector<256x32xf32>, vector<24x256xf32> -> vector<24x256xf32>
    %c0_3 = arith.constant 0 : index
    %c0_4 = arith.constant 0 : index
    %3 = vector.load %arg2[%c0_3, %c0_4] : memref<24x1xf32, #tpu.memory_space<vmem>>, vector<24x1xf32>
    %4 = vector.broadcast %3 : vector<24x1xf32> to vector<24x256xf32>
    %5 = arith.addf %2, %4 : vector<24x256xf32>
    %c0_5 = arith.constant 0 : index
    %c0_6 = arith.constant 0 : index
    %6 = vector.load %arg3[%c0_5, %c0_6] : memref<24x256xf32, #tpu.memory_space<vmem>>, vector<24x256xf32>
    tpu.vector_store %arg3[%c0_5, %c0_6], %5 {strides = array<i32>} : memref<24x256xf32, #tpu.memory_space<vmem>>, vector<24x256xf32>,
    return
  }
}

</mosaic_0001>

<llo_original>
// kernel: structsvm_forward.1
$region0: #{structsvm_forward.1}
  #allocation0 [shape = 'u32[]', space=smem, size = 0x4, offset = 0x4, fixed_abs, tag = 'smem constant byte address 0x4 - core index']
  #allocation1 [shape = 'u32[144,128]{1,0:T(1,128)}', space=vmem, size = 0x12000, scoped, tag = 'internal scratch']
  %s0 = inlined_call_operand.vmem [shape: f32[24,32], index: 0, kind: input, shape index: {}]
  %s1 = inlined_call_operand.hbm [shape: f32[256,32], index: 1, kind: input, shape index: {}]
  %s2 = inlined_call_operand.hbm [shape: f32[24,1], index: 2, kind: input, shape index: {}]
  %s3 = inlined_call_operand.vmem [shape: f32[24,256], index: 3, kind: output, shape index: {}]
  %s4 = sld [smem:[#allocation0]]
  $region30: #{structsvm_forward.1} parent=0
    _
  %s6 = ssub.s32 1, %s4
  %s7 = scalar_select 0, %s6, %s4
  $region1: #{structsvm_forward.1} parent=0
    #allocation2 [shape = 'u8[131072]{0}', space=vmem, size = 0x20000, scoped, tag = 'input window, operand 1, single buffered']
    #allocation3 [shape = 's32[1]{0}', space=sflag, size = 0x4, scoped, tag = 'scoped memory for structsvm_forward.1']
    #allocation4 [shape = 'u8[12288]{0}', space=vmem, size = 0x3000, scoped, tag = 'input window, operand 2, single buffered']
    #allocation5 [shape = 's32[1]{0}', space=sflag, size = 0x4, scoped, tag = 'scoped memory for structsvm_forward.1']
    %8 = vsyncpa [#allocation3], 0
    %9 = vsyncpa [#allocation5], 0
    // Predicated region
    $region2: #{structsvm_forward.1} parent=1 // pred_check
      _
    $region3: #{structsvm_forward.1} parent=1 // pred_check_branch
      %11 = sbr.rel (0) target = $region5
    $region4: #{structsvm_forward.1} parent=1 // pred_region
      _
    $region5: #{structsvm_forward.1} parent=1 // pred_fallthru
      _
    // Predicated region
    $region6: #{structsvm_forward.1} parent=1 // pred_check
      _
    $region7: #{structsvm_forward.1} parent=1 // pred_check_branch
      %13 = sbr.rel (0) target = $region9
    $region8: #{structsvm_forward.1} parent=1 // pred_region
      %s15 = ssub.s32 4096, 4096
      %16 = vsyncadd [#allocation3], %s15
      %s17 = sshll.u32 [#allocation2], 4
      %s18 = int_to_ptr.vmem [resolvable:$true] %s17
      %23 = dma.hbm_to_vmem [thread:$0]  %s1, 4096, %s18, [#allocation3], 128, 128, 8
    $region9: #{structsvm_forward.1} parent=1 // pred_fallthru
      _
    // Predicated region
    $region10: #{structsvm_forward.1} parent=1 // pred_check
      _
    $region11: #{structsvm_forward.1} parent=1 // pred_check_branch
      %25 = sbr.rel (0) target = $region13
    $region12: #{structsvm_forward.1} parent=1 // pred_region
      %s27 = ssub.s32 384, 384
      %28 = vsyncadd [#allocation5], %s27
      %s29 = sshll.u32 [#allocation4], 4
      %s30 = int_to_ptr.vmem [resolvable:$true] %s29
      %35 = dma.hbm_to_vmem [thread:$0]  %s2, 384, %s30, [#allocation5], 128, 128, 8
    $region13: #{structsvm_forward.1} parent=1 // pred_fallthru
      _
    // Predicated region
    $region14: #{structsvm_forward.1} parent=1 // pred_check
      _
    $region15: #{structsvm_forward.1} parent=1 // pred_check_branch
      %37 = sbr.rel (0) target = $region17
    $region16: #{structsvm_forward.1} parent=1 // pred_region
      %38 = dma.done [#allocation3], 4096
    $region17: #{structsvm_forward.1} parent=1 // pred_fallthru
      _
    // Predicated region
    $region18: #{structsvm_forward.1} parent=1 // pred_check
      _
    $region19: #{structsvm_forward.1} parent=1 // pred_check_branch
      %40 = sbr.rel (0) target = $region21
    $region20: #{structsvm_forward.1} parent=1 // pred_region
      %41 = dma.done [#allocation5], 384
    $region21: #{structsvm_forward.1} parent=1 // pred_fallthru
      _
    %v42 = vld [vmem:[%s0] sm:$0xff]
    %v43 = vld [vmem:[%s0 + $0x8] sm:$0xff]
    %v44 = vld [vmem:[%s0 + $0x10] sm:$0xff]
    %v45 = vld [vmem:[#allocation2] sm:$0xff]
    %v46 = vld [vmem:[#allocation2 + $0x8] sm:$0xff]
    %v47 = vld [vmem:[#allocation2 + $0x10] sm:$0xff]
    %v48 = vld [vmem:[#allocation2 + $0x18] sm:$0xff]
    %v49 = vld [vmem:[#allocation2 + $0x20] sm:$0xff]
    %v50 = vld [vmem:[#allocation2 + $0x28] sm:$0xff]
    %v51 = vld [vmem:[#allocation2 + $0x30] sm:$0xff]
    %v52 = vld [vmem:[#allocation2 + $0x38] sm:$0xff]
    %v53 = vld [vmem:[#allocation2 + $0x40] sm:$0xff]
    %v54 = vld [vmem:[#allocation2 + $0x48] sm:$0xff]
    %v55 = vld [vmem:[#allocation2 + $0x50] sm:$0xff]
    %v56 = vld [vmem:[#allocation2 + $0x58] sm:$0xff]
    %v57 = vld [vmem:[#allocation2 + $0x60] sm:$0xff]
    %v58 = vld [vmem:[#allocation2 + $0x68] sm:$0xff]
    %v59 = vld [vmem:[#allocation2 + $0x70] sm:$0xff]
    %v60 = vld [vmem:[#allocation2 + $0x78] sm:$0xff]
    %v61 = vld [vmem:[#allocation2 + $0x80] sm:$0xff]
    %v62 = vld [vmem:[#allocation2 + $0x88] sm:$0xff]
    %v63 = vld [vmem:[#allocation2 + $0x90] sm:$0xff]
    %v64 = vld [vmem:[#allocation2 + $0x98] sm:$0xff]
    %v65 = vld [vmem:[#allocation2 + $0xa0] sm:$0xff]
    %v66 = vld [vmem:[#allocation2 + $0xa8] sm:$0xff]
    %v67 = vld [vmem:[#allocation2 + $0xb0] sm:$0xff]
    %v68 = vld [vmem:[#allocation2 + $0xb8] sm:$0xff]
    %v69 = vld [vmem:[#allocation2 + $0xc0] sm:$0xff]
    %v70 = vld [vmem:[#allocation2 + $0xc8] sm:$0xff]
    %v71 = vld [vmem:[#allocation2 + $0xd0] sm:$0xff]
    %v72 = vld [vmem:[#allocation2 + $0xd8] sm:$0xff]
    %v73 = vld [vmem:[#allocation2 + $0xe0] sm:$0xff]
    %v74 = vld [vmem:[#allocation2 + $0xe8] sm:$0xff]
    %v75 = vld [vmem:[#allocation2 + $0xf0] sm:$0xff]
    %v76 = vld [vmem:[#allocation2 + $0xf8] sm:$0xff]
    %v77 = vld [vmem:[#allocation4] sm:$0xff]
    %v78 = vld [vmem:[#allocation4 + $0x8] sm:$0xff]
    %v79 = vld [vmem:[#allocation4 + $0x10] sm:$0xff]
    %81 = vset.pattern.permute.xlu0 0
    %82 = vperm.xlu0 %81, %v77
    %v83 = vpop.permute.xlu0 %82
    %86 = vset.pattern.permute.xlu0 0
    %87 = vperm.xlu0 %86, %v78
    %v88 = vpop.permute.xlu0 %87
    %91 = vset.pattern.permute.xlu0 0
    %92 = vperm.xlu0 %91, %v79
    %v93 = vpop.permute.xlu0 %92
    %vm95 = vcmask 261120
    %v97 = vsel %vm95, %v42, 0
    %v100 = vsel %vm95, %v43, 0
    %v103 = vsel %vm95, %v44, 0
    %v106 = vsel %vm95, %v45, 0
    %v109 = vsel %vm95, %v46, 0
    %v112 = vsel %vm95, %v47, 0
    %v115 = vsel %vm95, %v48, 0
    %v118 = vsel %vm95, %v49, 0
    %v121 = vsel %vm95, %v50, 0
    %v124 = vsel %vm95, %v51, 0
    %v127 = vsel %vm95, %v52, 0
    %v130 = vsel %vm95, %v53, 0
    %v133 = vsel %vm95, %v54, 0
    %v136 = vsel %vm95, %v55, 0
    %v139 = vsel %vm95, %v56, 0
    %v142 = vsel %vm95, %v57, 0
    %v145 = vsel %vm95, %v58, 0
    %v148 = vsel %vm95, %v59, 0
    %v151 = vsel %vm95, %v60, 0
    %v154 = vsel %vm95, %v61, 0
    %v157 = vsel %vm95, %v62, 0
    %v160 = vsel %vm95, %v63, 0
    %v163 = vsel %vm95, %v64, 0
    %v166 = vsel %vm95, %v65, 0
    %v169 = vsel %vm95, %v66, 0
    %v172 = vsel %vm95, %v67, 0
    %v175 = vsel %vm95, %v68, 0
    %v178 = vsel %vm95, %v69, 0
    %v181 = vsel %vm95, %v70, 0
    %v184 = vsel %vm95, %v71, 0
    %v187 = vsel %vm95, %v72, 0
    %v190 = vsel %vm95, %v73, 0
    %v193 = vsel %vm95, %v74, 0
    %v196 = vsel %vm95, %v75, 0
    %v199 = vsel %vm95, %v76, 0
    %201 = vmatprep.subr.mxu0 0.0
    %v202 = vand.u32 %v106, 4294901760
    %203 = vmatpush1.xpose.msra.mxu0 %v202
    %204 = vmatprep.subr.mxu0 0.0
    %v205 = vand.u32 %v109, 4294901760
    %206 = vmatpush1.xpose.msra.mxu0 %v205
    %207 = vmatprep.subr.mxu0 0.0
    %v208 = vand.u32 %v112, 4294901760
    %209 = vmatpush1.xpose.msra.mxu0 %v208
    %210 = vmatprep.subr.mxu0 0.0
    %v211 = vand.u32 %v115, 4294901760
    %212 = vmatpush1.xpose.msra.mxu0 %v211
    %213 = vmatprep.subr.mxu0 0.0
    %v214 = vand.u32 %v118, 4294901760
    %215 = vmatpush1.xpose.msra.mxu0 %v214
    %216 = vmatprep.subr.mxu0 0.0
    %v217 = vand.u32 %v121, 4294901760
    %218 = vmatpush1.xpose.msra.mxu0 %v217
    %219 = vmatprep.subr.mxu0 0.0
    %v220 = vand.u32 %v124, 4294901760
    %221 = vmatpush1.xpose.msra.mxu0 %v220
    %222 = vmatprep.subr.mxu0 0.0
    %v223 = vand.u32 %v127, 4294901760
    %224 = vmatpush1.xpose.msra.mxu0 %v223
    %225 = vmatprep.subr.mxu0 0.0
    %v226 = vand.u32 %v130, 4294901760
    %227 = vmatpush1.xpose.msra.mxu0 %v226
    %228 = vmatprep.subr.mxu0 0.0
    %v229 = vand.u32 %v133, 4294901760
    %230 = vmatpush1.xpose.msra.mxu0 %v229
    %231 = vmatprep.subr.mxu0 0.0
    %v232 = vand.u32 %v136, 4294901760
    %233 = vmatpush1.xpose.msra.mxu0 %v232
    %234 = vmatprep.subr.mxu0 0.0
    %v235 = vand.u32 %v139, 4294901760
    %236 = vmatpush1.xpose.msra.mxu0 %v235
    %237 = vmatprep.subr.mxu0 0.0
    %v238 = vand.u32 %v142, 4294901760
    %239 = vmatpush1.xpose.msra.mxu0 %v238
    %240 = vmatprep.subr.mxu0 0.0
    %v241 = vand.u32 %v145, 4294901760
    %242 = vmatpush1.xpose.msra.mxu0 %v241
    %243 = vmatprep.subr.mxu0 0.0
    %v244 = vand.u32 %v148, 4294901760
    %245 = vmatpush1.xpose.msra.mxu0 %v244
    %246 = vmatprep.subr.mxu0 0.0
    %v247 = vand.u32 %v151, 4294901760
    %248 = vmatpush1.xpose.msra.mxu0 %v247
    %249 = vmatprep.subr.mxu0 0.0
    %v250 = vand.u32 %v154, 4294901760
    %251 = vmatpush1.xpose.msra.mxu0 %v250
    %252 = vmatprep.subr.mxu0 0.0
    %v253 = vand.u32 %v157, 4294901760
    %254 = vmatpush1.xpose.msra.mxu0 %v253
    %255 = vmatprep.subr.mxu0 0.0
    %v256 = vand.u32 %v160, 4294901760
    %257 = vmatpush1.xpose.msra.mxu0 %v256
    %258 = vmatprep.subr.mxu0 0.0
    %v259 = vand.u32 %v163, 4294901760
    %260 = vmatpush1.xpose.msra.mxu0 %v259
    %261 = vmatprep.subr.mxu0 0.0
    %v262 = vand.u32 %v166, 4294901760
    %263 = vmatpush1.xpose.msra.mxu0 %v262
    %264 = vmatprep.subr.mxu0 0.0
    %v265 = vand.u32 %v169, 4294901760
    %266 = vmatpush1.xpose.msra.mxu0 %v265
    %267 = vmatprep.subr.mxu0 0.0
    %v268 = vand.u32 %v172, 4294901760
    %269 = vmatpush1.xpose.msra.mxu0 %v268
    %270 = vmatprep.subr.mxu0 0.0
    %v271 = vand.u32 %v175, 4294901760
    %272 = vmatpush1.xpose.msra.mxu0 %v271
    %273 = vmatprep.subr.mxu0 0.0
    %v274 = vand.u32 %v178, 4294901760
    %275 = vmatpush1.xpose.msra.mxu0 %v274
    %276 = vmatprep.subr.mxu0 0.0
    %v277 = vand.u32 %v181, 4294901760
    %278 = vmatpush1.xpose.msra.mxu0 %v277
    %279 = vmatprep.subr.mxu0 0.0
    %v280 = vand.u32 %v184, 4294901760
    %281 = vmatpush1.xpose.msra.mxu0 %v280
    %282 = vmatprep.subr.mxu0 0.0
    %v283 = vand.u32 %v187, 4294901760
    %284 = vmatpush1.xpose.msra.mxu0 %v283
    %285 = vmatprep.subr.mxu0 0.0
    %v286 = vand.u32 %v190, 4294901760
    %287 = vmatpush1.xpose.msra.mxu0 %v286
    %288 = vmatprep.subr.mxu0 0.0
    %v289 = vand.u32 %v193, 4294901760
    %290 = vmatpush1.xpose.msra.mxu0 %v289
    %291 = vmatprep.subr.mxu0 0.0
    %v292 = vand.u32 %v196, 4294901760
    %293 = vmatpush1.xpose.msra.mxu0 %v292
    %294 = vmatprep.subr.mxu0 0.0
    %v295 = vand.u32 %v199, 4294901760
    %296 = vmatpush1.xpose.msra.mxu0 %v295
    %297 = vmatprep.mubr.f32.mxu0 0.0
    %v298 = vand.u32 %v97, 4294901760
    %v299 = vsub.f32 %v97, %v298
    %v300 = vand.u32 %v299, 4294901760
    %v301 = vsub.f32 %v299, %v300
    %v302 = vand.u32 %v301, 4294901760
    %303 = vmatmul.mubr.f32.gmra.mrb[0].mxu0 %v302
    %v304 = vpop.f32.mrb[0].mxu0
    %v305 = vadd.f32 %v83, %v304
    %v306 = vpop.f32.mrb[0].mxu0
    %v307 = vadd.f32 %v83, %v306
    %308 = vmatprep.mubr.f32.mxu0 0.0
    %v309 = vand.u32 %v100, 4294901760
    %v310 = vsub.f32 %v100, %v309
    %v311 = vand.u32 %v310, 4294901760
    %v312 = vsub.f32 %v310, %v311
    %v313 = vand.u32 %v312, 4294901760
    %314 = vmatmul.mubr.f32.gmra.mrb[0].mxu0 %v313
    %v315 = vpop.f32.mrb[0].mxu0
    %v316 = vadd.f32 %v88, %v315
    %v317 = vpop.f32.mrb[0].mxu0
    %v318 = vadd.f32 %v88, %v317
    %319 = vmatprep.mubr.f32.mxu0 0.0
    %v320 = vand.u32 %v103, 4294901760
    %v321 = vsub.f32 %v103, %v320
    %v322 = vand.u32 %v321, 4294901760
    %v323 = vsub.f32 %v321, %v322
    %v324 = vand.u32 %v323, 4294901760
    %325 = vmatmul.mubr.f32.gmra.mrb[0].mxu0 %v324
    %v326 = vpop.f32.mrb[0].mxu0
    %v327 = vadd.f32 %v93, %v326
    %v328 = vpop.f32.mrb[0].mxu0
    %v329 = vadd.f32 %v93, %v328
    %330 = vdwg.mxu0
    %331 = vmatprep.subr.mxu0 0.0
    %v332 = vand.u32 %v106, 4294901760
    %v333 = vsub.f32 %v106, %v332
    %v334 = vand.u32 %v333, 4294901760
    %v335 = vsub.f32 %v333, %v334
    %v336 = vand.u32 %v335, 4294901760
    %337 = vmatpush1.xpose.msra.mxu0 %v336
    %338 = vmatprep.subr.mxu0 0.0
    %v339 = vand.u32 %v109, 4294901760
    %v340 = vsub.f32 %v109, %v339
    %v341 = vand.u32 %v340, 4294901760
    %v342 = vsub.f32 %v340, %v341
    %v343 = vand.u32 %v342, 4294901760
    %344 = vmatpush1.xpose.msra.mxu0 %v343
    %345 = vmatprep.subr.mxu0 0.0
    %v346 = vand.u32 %v112, 4294901760
    %v347 = vsub.f32 %v112, %v346
    %v348 = vand.u32 %v347, 4294901760
    %v349 = vsub.f32 %v347, %v348
    %v350 = vand.u32 %v349, 4294901760
    %351 = vmatpush1.xpose.msra.mxu0 %v350
    %352 = vmatprep.subr.mxu0 0.0
    %v353 = vand.u32 %v115, 4294901760
    %v354 = vsub.f32 %v115, %v353
    %v355 = vand.u32 %v354, 4294901760
    %v356 = vsub.f32 %v354, %v355
    %v357 = vand.u32 %v356, 4294901760
    %358 = vmatpush1.xpose.msra.mxu0 %v357
    %359 = vmatprep.subr.mxu0 0.0
    %v360 = vand.u32 %v118, 4294901760
    %v361 = vsub.f32 %v118, %v360
    %v362 = vand.u32 %v361, 4294901760
    %v363 = vsub.f32 %v361, %v362
    %v364 = vand.u32 %v363, 4294901760
    %365 = vmatpush1.xpose.msra.mxu0 %v364
    %366 = vmatprep.subr.mxu0 0.0
    %v367 = vand.u32 %v121, 4294901760
    %v368 = vsub.f32 %v121, %v367
    %v369 = vand.u32 %v368, 4294901760
    %v370 = vsub.f32 %v368, %v369
    %v371 = vand.u32 %v370, 4294901760
    %372 = vmatpush1.xpose.msra.mxu0 %v371
    %373 = vmatprep.subr.mxu0 0.0
    %v374 = vand.u32 %v124, 4294901760
    %v375 = vsub.f32 %v124, %v374
    %v376 = vand.u32 %v375, 4294901760
    %v377 = vsub.f32 %v375, %v376
    %v378 = vand.u32 %v377, 4294901760
    %379 = vmatpush1.xpose.msra.mxu0 %v378
    %380 = vmatprep.subr.mxu0 0.0
    %v381 = vand.u32 %v127, 4294901760
    %v382 = vsub.f32 %v127, %v381
    %v383 = vand.u32 %v382, 4294901760
    %v384 = vsub.f32 %v382, %v383
    %v385 = vand.u32 %v384, 4294901760
    %386 = vmatpush1.xpose.msra.mxu0 %v385
    %387 = vmatprep.subr.mxu0 0.0
    %v388 = vand.u32 %v130, 4294901760
    %v389 = vsub.f32 %v130, %v388
    %v390 = vand.u32 %v389, 4294901760
    %v391 = vsub.f32 %v389, %v390
    %v392 = vand.u32 %v391, 4294901760
    %393 = vmatpush1.xpose.msra.mxu0 %v392
    %394 = vmatprep.subr.mxu0 0.0
    %v395 = vand.u32 %v133, 4294901760
    %v396 = vsub.f32 %v133, %v395
    %v397 = vand.u32 %v396, 4294901760
    %v398 = vsub.f32 %v396, %v397
    %v399 = vand.u32 %v398, 4294901760
    %400 = vmatpush1.xpose.msra.mxu0 %v399
    %401 = vmatprep.subr.mxu0 0.0
    %v402 = vand.u32 %v136, 4294901760
    %v403 = vsub.f32 %v136, %v402
    %v404 = vand.u32 %v403, 4294901760
    %v405 = vsub.f32 %v403, %v404
    %v406 = vand.u32 %v405, 4294901760
    %407 = vmatpush1.xpose.msra.mxu0 %v406
    %408 = vmatprep.subr.mxu0 0.0
    %v409 = vand.u32 %v139, 4294901760
    %v410 = vsub.f32 %v139, %v409
    %v411 = vand.u32 %v410, 4294901760
    %v412 = vsub.f32 %v410, %v411
    %v413 = vand.u32 %v412, 4294901760
    %414 = vmatpush1.xpose.msra.mxu0 %v413
    %415 = vmatprep.subr.mxu0 0.0
    %v416 = vand.u32 %v142, 4294901760
    %v417 = vsub.f32 %v142, %v416
    %v418 = vand.u32 %v417, 4294901760
    %v419 = vsub.f32 %v417, %v418
    %v420 = vand.u32 %v419, 4294901760
    %421 = vmatpush1.xpose.msra.mxu0 %v420
    %422 = vmatprep.subr.mxu0 0.0
    %v423 = vand.u32 %v145, 4294901760
    %v424 = vsub.f32 %v145, %v423
    %v425 = vand.u32 %v424, 4294901760
    %v426 = vsub.f32 %v424, %v425
    %v427 = vand.u32 %v426, 4294901760
    %428 = vmatpush1.xpose.msra.mxu0 %v427
    %429 = vmatprep.subr.mxu0 0.0
    %v430 = vand.u32 %v148, 4294901760
    %v431 = vsub.f32 %v148, %v430
    %v432 = vand.u32 %v431, 4294901760
    %v433 = vsub.f32 %v431, %v432
    %v434 = vand.u32 %v433, 4294901760
    %435 = vmatpush1.xpose.msra.mxu0 %v434
    %436 = vmatprep.subr.mxu0 0.0
    %v437 = vand.u32 %v151, 4294901760
    %v438 = vsub.f32 %v151, %v437
    %v439 = vand.u32 %v438, 4294901760
    %v440 = vsub.f32 %v438, %v439
    %v441 = vand.u32 %v440, 4294901760
    %442 = vmatpush1.xpose.msra.mxu0 %v441
    %443 = vmatprep.subr.mxu0 0.0
    %v444 = vand.u32 %v154, 4294901760
    %v445 = vsub.f32 %v154, %v444
    %v446 = vand.u32 %v445, 4294901760
    %v447 = vsub.f32 %v445, %v446
    %v448 = vand.u32 %v447, 4294901760
    %449 = vmatpush1.xpose.msra.mxu0 %v448
    %450 = vmatprep.subr.mxu0 0.0
    %v451 = vand.u32 %v157, 4294901760
    %v452 = vsub.f32 %v157, %v451
    %v453 = vand.u32 %v452, 4294901760
    %v454 = vsub.f32 %v452, %v453
    %v455 = vand.u32 %v454, 4294901760
    %456 = vmatpush1.xpose.msra.mxu0 %v455
    %457 = vmatprep.subr.mxu0 0.0
    %v458 = vand.u32 %v160, 4294901760
    %v459 = vsub.f32 %v160, %v458
    %v460 = vand.u32 %v459, 4294901760
    %v461 = vsub.f32 %v459, %v460
    %v462 = vand.u32 %v461, 4294901760
    %463 = vmatpush1.xpose.msra.mxu0 %v462
    %464 = vmatprep.subr.mxu0 0.0
    %v465 = vand.u32 %v163, 4294901760
    %v466 = vsub.f32 %v163, %v465
    %v467 = vand.u32 %v466, 4294901760
    %v468 = vsub.f32 %v466, %v467
    %v469 = vand.u32 %v468, 4294901760
    %470 = vmatpush1.xpose.msra.mxu0 %v469
    %471 = vmatprep.subr.mxu0 0.0
    %v472 = vand.u32 %v166, 4294901760
    %v473 = vsub.f32 %v166, %v472
    %v474 = vand.u32 %v473, 4294901760
    %v475 = vsub.f32 %v473, %v474
    %v476 = vand.u32 %v475, 4294901760
    %477 = vmatpush1.xpose.msra.mxu0 %v476
    %478 = vmatprep.subr.mxu0 0.0
    %v479 = vand.u32 %v169, 4294901760
    %v480 = vsub.f32 %v169, %v479
    %v481 = vand.u32 %v480, 4294901760
    %v482 = vsub.f32 %v480, %v481
    %v483 = vand.u32 %v482, 4294901760
    %484 = vmatpush1.xpose.msra.mxu0 %v483
    %485 = vmatprep.subr.mxu0 0.0
    %v486 = vand.u32 %v172, 4294901760
    %v487 = vsub.f32 %v172, %v486
    %v488 = vand.u32 %v487, 4294901760
    %v489 = vsub.f32 %v487, %v488
    %v490 = vand.u32 %v489, 4294901760
    %491 = vmatpush1.xpose.msra.mxu0 %v490
    %492 = vmatprep.subr.mxu0 0.0
    %v493 = vand.u32 %v175, 4294901760
    %v494 = vsub.f32 %v175, %v493
    %v495 = vand.u32 %v494, 4294901760
    %v496 = vsub.f32 %v494, %v495
    %v497 = vand.u32 %v496, 4294901760
    %498 = vmatpush1.xpose.msra.mxu0 %v497
    %499 = vmatprep.subr.mxu0 0.0
    %v500 = vand.u32 %v178, 4294901760
    %v501 = vsub.f32 %v178, %v500
    %v502 = vand.u32 %v501, 4294901760
    %v503 = vsub.f32 %v501, %v502
    %v504 = vand.u32 %v503, 4294901760
    %505 = vmatpush1.xpose.msra.mxu0 %v504
    %506 = vmatprep.subr.mxu0 0.0
    %v507 = vand.u32 %v181, 4294901760
    %v508 = vsub.f32 %v181, %v507
    %v509 = vand.u32 %v508, 4294901760
    %v510 = vsub.f32 %v508, %v509
    %v511 = vand.u32 %v510, 4294901760
    %512 = vmatpush1.xpose.msra.mxu0 %v511
    %513 = vmatprep.subr.mxu0 0.0
    %v514 = vand.u32 %v184, 4294901760
    %v515 = vsub.f32 %v184, %v514
    %v516 = vand.u32 %v515, 4294901760
    %v517 = vsub.f32 %v515, %v516
    %v518 = vand.u32 %v517, 4294901760
    %519 = vmatpush1.xpose.msra.mxu0 %v518
    %520 = vmatprep.subr.mxu0 0.0
    %v521 = vand.u32 %v187, 4294901760
    %v522 = vsub.f32 %v187, %v521
    %v523 = vand.u32 %v522, 4294901760
    %v524 = vsub.f32 %v522, %v523
    %v525 = vand.u32 %v524, 4294901760
    %526 = vmatpush1.xpose.msra.mxu0 %v525
    %527 = vmatprep.subr.mxu0 0.0
    %v528 = vand.u32 %v190, 4294901760
    %v529 = vsub.f32 %v190, %v528
    %v530 = vand.u32 %v529, 4294901760
    %v531 = vsub.f32 %v529, %v530
    %v532 = vand.u32 %v531, 4294901760
    %533 = vmatpush1.xpose.msra.mxu0 %v532
    %534 = vmatprep.subr.mxu0 0.0
    %v535 = vand.u32 %v193, 4294901760
    %v536 = vsub.f32 %v193, %v535
    %v537 = vand.u32 %v536, 4294901760
    %v538 = vsub.f32 %v536, %v537
    %v539 = vand.u32 %v538, 4294901760
    %540 = vmatpush1.xpose.msra.mxu0 %v539
    %541 = vmatprep.subr.mxu0 0.0
    %v542 = vand.u32 %v196, 4294901760
    %v543 = vsub.f32 %v196, %v542
    %v544 = vand.u32 %v543, 4294901760
    %v545 = vsub.f32 %v543, %v544
    %v546 = vand.u32 %v545, 4294901760
    %547 = vmatpush1.xpose.msra.mxu0 %v546
    %548 = vmatprep.subr.mxu0 0.0
    %v549 = vand.u32 %v199, 4294901760
    %v550 = vsub.f32 %v199, %v549
    %v551 = vand.u32 %v550, 4294901760
    %v552 = vsub.f32 %v550, %v551
    %v553 = vand.u32 %v552, 4294901760
    %554 = vmatpush1.xpose.msra.mxu0 %v553
    %555 = vmatprep.mubr.f32.mxu0 0.0
    %v556 = vand.u32 %v97, 4294901760
    %557 = vmatmul.mubr.f32.gmra.mrb[0].mxu0 %v556
    %v558 = vpop.f32.mrb[0].mxu0
    %v559 = vadd.f32 %v305, %v558
    %v560 = vpop.f32.mrb[0].mxu0
    %v561 = vadd.f32 %v307, %v560
    %562 = vmatprep.mubr.f32.mxu0 0.0
    %v563 = vand.u32 %v100, 4294901760
    %564 = vmatmul.mubr.f32.gmra.mrb[0].mxu0 %v563
    %v565 = vpop.f32.mrb[0].mxu0
    %v566 = vadd.f32 %v316, %v565
    %v567 = vpop.f32.mrb[0].mxu0
    %v568 = vadd.f32 %v318, %v567
    %569 = vmatprep.mubr.f32.mxu0 0.0
    %v570 = vand.u32 %v103, 4294901760
    %571 = vmatmul.mubr.f32.gmra.mrb[0].mxu0 %v570
    %v572 = vpop.f32.mrb[0].mxu0
    %v573 = vadd.f32 %v327, %v572
    %v574 = vpop.f32.mrb[0].mxu0
    %v575 = vadd.f32 %v329, %v574
    %576 = vdwg.mxu0
    %577 = vmatprep.subr.mxu0 0.0
    %v578 = vand.u32 %v106, 4294901760
    %v579 = vsub.f32 %v106, %v578
    %580 = vmatpush1.xpose.msra.mxu0 %v579
    %581 = vmatprep.subr.mxu0 0.0
    %v582 = vand.u32 %v109, 4294901760
    %v583 = vsub.f32 %v109, %v582
    %584 = vmatpush1.xpose.msra.mxu0 %v583
    %585 = vmatprep.subr.mxu0 0.0
    %v586 = vand.u32 %v112, 4294901760
    %v587 = vsub.f32 %v112, %v586
    %588 = vmatpush1.xpose.msra.mxu0 %v587
    %589 = vmatprep.subr.mxu0 0.0
    %v590 = vand.u32 %v115, 4294901760
    %v591 = vsub.f32 %v115, %v590
    %592 = vmatpush1.xpose.msra.mxu0 %v591
    %593 = vmatprep.subr.mxu0 0.0
    %v594 = vand.u32 %v118, 4294901760
    %v595 = vsub.f32 %v118, %v594
    %596 = vmatpush1.xpose.msra.mxu0 %v595
    %597 = vmatprep.subr.mxu0 0.0
    %v598 = vand.u32 %v121, 4294901760
    %v599 = vsub.f32 %v121, %v598
    %600 = vmatpush1.xpose.msra.mxu0 %v599
    %601 = vmatprep.subr.mxu0 0.0
    %v602 = vand.u32 %v124, 4294901760
    %v603 = vsub.f32 %v124, %v602
    %604 = vmatpush1.xpose.msra.mxu0 %v603
    %605 = vmatprep.subr.mxu0 0.0
    %v606 = vand.u32 %v127, 4294901760
    %v607 = vsub.f32 %v127, %v606
    %608 = vmatpush1.xpose.msra.mxu0 %v607
    %609 = vmatprep.subr.mxu0 0.0
    %v610 = vand.u32 %v130, 4294901760
    %v611 = vsub.f32 %v130, %v610
    %612 = vmatpush1.xpose.msra.mxu0 %v611
    %613 = vmatprep.subr.mxu0 0.0
    %v614 = vand.u32 %v133, 4294901760
    %v615 = vsub.f32 %v133, %v614
    %616 = vmatpush1.xpose.msra.mxu0 %v615
    %617 = vmatprep.subr.mxu0 0.0
    %v618 = vand.u32 %v136, 4294901760
    %v619 = vsub.f32 %v136, %v618
    %620 = vmatpush1.xpose.msra.mxu0 %v619
    %621 = vmatprep.subr.mxu0 0.0
    %v622 = vand.u32 %v139, 4294901760
    %v623 = vsub.f32 %v139, %v622
    %624 = vmatpush1.xpose.msra.mxu0 %v623
    %625 = vmatprep.subr.mxu0 0.0
    %v626 = vand.u32 %v142, 4294901760
    %v627 = vsub.f32 %v142, %v626
    %628 = vmatpush1.xpose.msra.mxu0 %v627
    %629 = vmatprep.subr.mxu0 0.0
    %v630 = vand.u32 %v145, 4294901760
    %v631 = vsub.f32 %v145, %v630
    %632 = vmatpush1.xpose.msra.mxu0 %v631
    %633 = vmatprep.subr.mxu0 0.0
    %v634 = vand.u32 %v148, 4294901760
    %v635 = vsub.f32 %v148, %v634
    %636 = vmatpush1.xpose.msra.mxu0 %v635
    %637 = vmatprep.subr.mxu0 0.0
    %v638 = vand.u32 %v151, 4294901760
    %v639 = vsub.f32 %v151, %v638
    %640 = vmatpush1.xpose.msra.mxu0 %v639
    %641 = vmatprep.subr.mxu0 0.0
    %v642 = vand.u32 %v154, 4294901760
    %v643 = vsub.f32 %v154, %v642
    %644 = vmatpush1.xpose.msra.mxu0 %v643
    %645 = vmatprep.subr.mxu0 0.0
    %v646 = vand.u32 %v157, 4294901760
    %v647 = vsub.f32 %v157, %v646
    %648 = vmatpush1.xpose.msra.mxu0 %v647
    %649 = vmatprep.subr.mxu0 0.0
    %v650 = vand.u32 %v160, 4294901760
    %v651 = vsub.f32 %v160, %v650
    %652 = vmatpush1.xpose.msra.mxu0 %v651
    %653 = vmatprep.subr.mxu0 0.0
    %v654 = vand.u32 %v163, 4294901760
    %v655 = vsub.f32 %v163, %v654
    %656 = vmatpush1.xpose.msra.mxu0 %v655
    %657 = vmatprep.subr.mxu0 0.0
    %v658 = vand.u32 %v166, 4294901760
    %v659 = vsub.f32 %v166, %v658
    %660 = vmatpush1.xpose.msra.mxu0 %v659
    %661 = vmatprep.subr.mxu0 0.0
    %v662 = vand.u32 %v169, 4294901760
    %v663 = vsub.f32 %v169, %v662
    %664 = vmatpush1.xpose.msra.mxu0 %v663
    %665 = vmatprep.subr.mxu0 0.0
    %v666 = vand.u32 %v172, 4294901760
    %v667 = vsub.f32 %v172, %v666
    %668 = vmatpush1.xpose.msra.mxu0 %v667
    %669 = vmatprep.subr.mxu0 0.0
    %v670 = vand.u32 %v175, 4294901760
    %v671 = vsub.f32 %v175, %v670
    %672 = vmatpush1.xpose.msra.mxu0 %v671
    %673 = vmatprep.subr.mxu0 0.0
    %v674 = vand.u32 %v178, 4294901760
    %v675 = vsub.f32 %v178, %v674
    %676 = vmatpush1.xpose.msra.mxu0 %v675
    %677 = vmatprep.subr.mxu0 0.0
    %v678 = vand.u32 %v181, 4294901760
    %v679 = vsub.f32 %v181, %v678
    %680 = vmatpush1.xpose.msra.mxu0 %v679
    %681 = vmatprep.subr.mxu0 0.0
    %v682 = vand.u32 %v184, 4294901760
    %v683 = vsub.f32 %v184, %v682
    %684 = vmatpush1.xpose.msra.mxu0 %v683
    %685 = vmatprep.subr.mxu0 0.0
    %v686 = vand.u32 %v187, 4294901760
    %v687 = vsub.f32 %v187, %v686
    %688 = vmatpush1.xpose.msra.mxu0 %v687
    %689 = vmatprep.subr.mxu0 0.0
    %v690 = vand.u32 %v190, 4294901760
    %v691 = vsub.f32 %v190, %v690
    %692 = vmatpush1.xpose.msra.mxu0 %v691
    %693 = vmatprep.subr.mxu0 0.0
    %v694 = vand.u32 %v193, 4294901760
    %v695 = vsub.f32 %v193, %v694
    %696 = vmatpush1.xpose.msra.mxu0 %v695
    %697 = vmatprep.subr.mxu0 0.0
    %v698 = vand.u32 %v196, 4294901760
    %v699 = vsub.f32 %v196, %v698
    %700 = vmatpush1.xpose.msra.mxu0 %v699
    %701 = vmatprep.subr.mxu0 0.0
    %v702 = vand.u32 %v199, 4294901760
    %v703 = vsub.f32 %v199, %v702
    %704 = vmatpush1.xpose.msra.mxu0 %v703
    %705 = vmatprep.mubr.f32.mxu0 0.0
    %v706 = vand.u32 %v97, 4294901760
    %v707 = vsub.f32 %v97, %v706
    %708 = vmatmul.mubr.f32.gmra.mrb[0].mxu0 %v707
    %v709 = vpop.f32.mrb[0].mxu0
    %v710 = vadd.f32 %v559, %v709
    %v711 = vpop.f32.mrb[0].mxu0
    %v712 = vadd.f32 %v561, %v711
    %713 = vmatprep.mubr.f32.mxu0 0.0
    %v714 = vand.u32 %v100, 4294901760
    %v715 = vsub.f32 %v100, %v714
    %716 = vmatmul.mubr.f32.gmra.mrb[0].mxu0 %v715
    %v717 = vpop.f32.mrb[0].mxu0
    %v718 = vadd.f32 %v566, %v717
    %v719 = vpop.f32.mrb[0].mxu0
    %v720 = vadd.f32 %v568, %v719
    %721 = vmatprep.mubr.f32.mxu0 0.0
    %v722 = vand.u32 %v103, 4294901760
    %v723 = vsub.f32 %v103, %v722
    %724 = vmatmul.mubr.f32.gmra.mrb[0].mxu0 %v723
    %v725 = vpop.f32.mrb[0].mxu0
    %v726 = vadd.f32 %v573, %v725
    %v727 = vpop.f32.mrb[0].mxu0
    %v728 = vadd.f32 %v575, %v727
    %729 = vdwg.mxu0
    %730 = vmatprep.subr.mxu0 0.0
    %v731 = vand.u32 %v106, 4294901760
    %732 = vmatpush1.xpose.msra.mxu0 %v731
    %733 = vmatprep.subr.mxu0 0.0
    %v734 = vand.u32 %v109, 4294901760
    %735 = vmatpush1.xpose.msra.mxu0 %v734
    %736 = vmatprep.subr.mxu0 0.0
    %v737 = vand.u32 %v112, 4294901760
    %738 = vmatpush1.xpose.msra.mxu0 %v737
    %739 = vmatprep.subr.mxu0 0.0
    %v740 = vand.u32 %v115, 4294901760
    %741 = vmatpush1.xpose.msra.mxu0 %v740
    %742 = vmatprep.subr.mxu0 0.0
    %v743 = vand.u32 %v118, 4294901760
    %744 = vmatpush1.xpose.msra.mxu0 %v743
    %745 = vmatprep.subr.mxu0 0.0
    %v746 = vand.u32 %v121, 4294901760
    %747 = vmatpush1.xpose.msra.mxu0 %v746
    %748 = vmatprep.subr.mxu0 0.0
    %v749 = vand.u32 %v124, 4294901760
    %750 = vmatpush1.xpose.msra.mxu0 %v749
    %751 = vmatprep.subr.mxu0 0.0
    %v752 = vand.u32 %v127, 4294901760
    %753 = vmatpush1.xpose.msra.mxu0 %v752
    %754 = vmatprep.subr.mxu0 0.0
    %v755 = vand.u32 %v130, 4294901760
    %756 = vmatpush1.xpose.msra.mxu0 %v755
    %757 = vmatprep.subr.mxu0 0.0
    %v758 = vand.u32 %v133, 4294901760
    %759 = vmatpush1.xpose.msra.mxu0 %v758
    %760 = vmatprep.subr.mxu0 0.0
    %v761 = vand.u32 %v136, 4294901760
    %762 = vmatpush1.xpose.msra.mxu0 %v761
    %763 = vmatprep.subr.mxu0 0.0
    %v764 = vand.u32 %v139, 4294901760
    %765 = vmatpush1.xpose.msra.mxu0 %v764
    %766 = vmatprep.subr.mxu0 0.0
    %v767 = vand.u32 %v142, 4294901760
    %768 = vmatpush1.xpose.msra.mxu0 %v767
    %769 = vmatprep.subr.mxu0 0.0
    %v770 = vand.u32 %v145, 4294901760
    %771 = vmatpush1.xpose.msra.mxu0 %v770
    %772 = vmatprep.subr.mxu0 0.0
    %v773 = vand.u32 %v148, 4294901760
    %774 = vmatpush1.xpose.msra.mxu0 %v773
    %775 = vmatprep.subr.mxu0 0.0
    %v776 = vand.u32 %v151, 4294901760
    %777 = vmatpush1.xpose.msra.mxu0 %v776
    %778 = vmatprep.subr.mxu0 0.0
    %v779 = vand.u32 %v154, 4294901760
    %780 = vmatpush1.xpose.msra.mxu0 %v779
    %781 = vmatprep.subr.mxu0 0.0
    %v782 = vand.u32 %v157, 4294901760
    %783 = vmatpush1.xpose.msra.mxu0 %v782
    %784 = vmatprep.subr.mxu0 0.0
    %v785 = vand.u32 %v160, 4294901760
    %786 = vmatpush1.xpose.msra.mxu0 %v785
    %787 = vmatprep.subr.mxu0 0.0
    %v788 = vand.u32 %v163, 4294901760
    %789 = vmatpush1.xpose.msra.mxu0 %v788
    %790 = vmatprep.subr.mxu0 0.0
    %v791 = vand.u32 %v166, 4294901760
    %792 = vmatpush1.xpose.msra.mxu0 %v791
    %793 = vmatprep.subr.mxu0 0.0
    %v794 = vand.u32 %v169, 4294901760
    %795 = vmatpush1.xpose.msra.mxu0 %v794
    %796 = vmatprep.subr.mxu0 0.0
    %v797 = vand.u32 %v172, 4294901760
    %798 = vmatpush1.xpose.msra.mxu0 %v797
    %799 = vmatprep.subr.mxu0 0.0
    %v800 = vand.u32 %v175, 4294901760
    %801 = vmatpush1.xpose.msra.mxu0 %v800
    %802 = vmatprep.subr.mxu0 0.0
    %v803 = vand.u32 %v178, 4294901760
    %804 = vmatpush1.xpose.msra.mxu0 %v803
    %805 = vmatprep.subr.mxu0 0.0
    %v806 = vand.u32 %v181, 4294901760
    %807 = vmatpush1.xpose.msra.mxu0 %v806
    %808 = vmatprep.subr.mxu0 0.0
    %v809 = vand.u32 %v184, 4294901760
    %810 = vmatpush1.xpose.msra.mxu0 %v809
    %811 = vmatprep.subr.mxu0 0.0
    %v812 = vand.u32 %v187, 4294901760
    %813 = vmatpush1.xpose.msra.mxu0 %v812
    %814 = vmatprep.subr.mxu0 0.0
    %v815 = vand.u32 %v190, 4294901760
    %816 = vmatpush1.xpose.msra.mxu0 %v815
    %817 = vmatprep.subr.mxu0 0.0
    %v818 = vand.u32 %v193, 4294901760
    %819 = vmatpush1.xpose.msra.mxu0 %v818
    %820 = vmatprep.subr.mxu0 0.0
    %v821 = vand.u32 %v196, 4294901760
    %822 = vmatpush1.xpose.msra.mxu0 %v821
    %823 = vmatprep.subr.mxu0 0.0
    %v824 = vand.u32 %v199, 4294901760
    %825 = vmatpush1.xpose.msra.mxu0 %v824
    %826 = vmatprep.mubr.f32.mxu0 0.0
    %v827 = vand.u32 %v97, 4294901760
    %v828 = vsub.f32 %v97, %v827
    %v829 = vand.u32 %v828, 4294901760
    %830 = vmatmul.mubr.f32.gmra.mrb[0].mxu0 %v829
    %v831 = vpop.f32.mrb[0].mxu0
    %v832 = vadd.f32 %v710, %v831
    %v833 = vpop.f32.mrb[0].mxu0
    %v834 = vadd.f32 %v712, %v833
    %835 = vmatprep.mubr.f32.mxu0 0.0
    %v836 = vand.u32 %v100, 4294901760
    %v837 = vsub.f32 %v100, %v836
    %v838 = vand.u32 %v837, 4294901760
    %839 = vmatmul.mubr.f32.gmra.mrb[0].mxu0 %v838
    %v840 = vpop.f32.mrb[0].mxu0
    %v841 = vadd.f32 %v718, %v840
    %v842 = vpop.f32.mrb[0].mxu0
    %v843 = vadd.f32 %v720, %v842
    %844 = vmatprep.mubr.f32.mxu0 0.0
    %v845 = vand.u32 %v103, 4294901760
    %v846 = vsub.f32 %v103, %v845
    %v847 = vand.u32 %v846, 4294901760
    %848 = vmatmul.mubr.f32.gmra.mrb[0].mxu0 %v847
    %v849 = vpop.f32.mrb[0].mxu0
    %v850 = vadd.f32 %v726, %v849
    %v851 = vpop.f32.mrb[0].mxu0
    %v852 = vadd.f32 %v728, %v851
    %853 = vdwg.mxu0
    %854 = vmatprep.subr.mxu0 0.0
    %v855 = vand.u32 %v106, 4294901760
    %v856 = vsub.f32 %v106, %v855
    %v857 = vand.u32 %v856, 4294901760
    %858 = vmatpush1.xpose.msra.mxu0 %v857
    %859 = vmatprep.subr.mxu0 0.0
    %v860 = vand.u32 %v109, 4294901760
    %v861 = vsub.f32 %v109, %v860
    %v862 = vand.u32 %v861, 4294901760
    %863 = vmatpush1.xpose.msra.mxu0 %v862
    %864 = vmatprep.subr.mxu0 0.0
    %v865 = vand.u32 %v112, 4294901760
    %v866 = vsub.f32 %v112, %v865
    %v867 = vand.u32 %v866, 4294901760
    %868 = vmatpush1.xpose.msra.mxu0 %v867
    %869 = vmatprep.subr.mxu0 0.0
    %v870 = vand.u32 %v115, 4294901760
    %v871 = vsub.f32 %v115, %v870
    %v872 = vand.u32 %v871, 4294901760
    %873 = vmatpush1.xpose.msra.mxu0 %v872
    %874 = vmatprep.subr.mxu0 0.0
    %v875 = vand.u32 %v118, 4294901760
    %v876 = vsub.f32 %v118, %v875
    %v877 = vand.u32 %v876, 4294901760
    %878 = vmatpush1.xpose.msra.mxu0 %v877
    %879 = vmatprep.subr.mxu0 0.0
    %v880 = vand.u32 %v121, 4294901760
    %v881 = vsub.f32 %v121, %v880
    %v882 = vand.u32 %v881, 4294901760
    %883 = vmatpush1.xpose.msra.mxu0 %v882
    %884 = vmatprep.subr.mxu0 0.0
    %v885 = vand.u32 %v124, 4294901760
    %v886 = vsub.f32 %v124, %v885
    %v887 = vand.u32 %v886, 4294901760
    %888 = vmatpush1.xpose.msra.mxu0 %v887
    %889 = vmatprep.subr.mxu0 0.0
    %v890 = vand.u32 %v127, 4294901760
    %v891 = vsub.f32 %v127, %v890
    %v892 = vand.u32 %v891, 4294901760
    %893 = vmatpush1.xpose.msra.mxu0 %v892
    %894 = vmatprep.subr.mxu0 0.0
    %v895 = vand.u32 %v130, 4294901760
    %v896 = vsub.f32 %v130, %v895
    %v897 = vand.u32 %v896, 4294901760
    %898 = vmatpush1.xpose.msra.mxu0 %v897
    %899 = vmatprep.subr.mxu0 0.0
    %v900 = vand.u32 %v133, 4294901760
    %v901 = vsub.f32 %v133, %v900
    %v902 = vand.u32 %v901, 4294901760
    %903 = vmatpush1.xpose.msra.mxu0 %v902
    %904 = vmatprep.subr.mxu0 0.0
    %v905 = vand.u32 %v136, 4294901760
    %v906 = vsub.f32 %v136, %v905
    %v907 = vand.u32 %v906, 4294901760
    %908 = vmatpush1.xpose.msra.mxu0 %v907
    %909 = vmatprep.subr.mxu0 0.0
    %v910 = vand.u32 %v139, 4294901760
    %v911 = vsub.f32 %v139, %v910
    %v912 = vand.u32 %v911, 4294901760
    %913 = vmatpush1.xpose.msra.mxu0 %v912
    %914 = vmatprep.subr.mxu0 0.0
    %v915 = vand.u32 %v142, 4294901760
    %v916 = vsub.f32 %v142, %v915
    %v917 = vand.u32 %v916, 4294901760
    %918 = vmatpush1.xpose.msra.mxu0 %v917
    %919 = vmatprep.subr.mxu0 0.0
    %v920 = vand.u32 %v145, 4294901760
    %v921 = vsub.f32 %v145, %v920
    %v922 = vand.u32 %v921, 4294901760
    %923 = vmatpush1.xpose.msra.mxu0 %v922
    %924 = vmatprep.subr.mxu0 0.0
    %v925 = vand.u32 %v148, 4294901760
    %v926 = vsub.f32 %v148, %v925
    %v927 = vand.u32 %v926, 4294901760
    %928 = vmatpush1.xpose.msra.mxu0 %v927
    %929 = vmatprep.subr.mxu0 0.0
    %v930 = vand.u32 %v151, 4294901760
    %v931 = vsub.f32 %v151, %v930
    %v932 = vand.u32 %v931, 4294901760
    %933 = vmatpush1.xpose.msra.mxu0 %v932
    %934 = vmatprep.subr.mxu0 0.0
    %v935 = vand.u32 %v154, 4294901760
    %v936 = vsub.f32 %v154, %v935
    %v937 = vand.u32 %v936, 4294901760
    %938 = vmatpush1.xpose.msra.mxu0 %v937
    %939 = vmatprep.subr.mxu0 0.0
    %v940 = vand.u32 %v157, 4294901760
    %v941 = vsub.f32 %v157, %v940
    %v942 = vand.u32 %v941, 4294901760
    %943 = vmatpush1.xpose.msra.mxu0 %v942
    %944 = vmatprep.subr.mxu0 0.0
    %v945 = vand.u32 %v160, 4294901760
    %v946 = vsub.f32 %v160, %v945
    %v947 = vand.u32 %v946, 4294901760
    %948 = vmatpush1.xpose.msra.mxu0 %v947
    %949 = vmatprep.subr.mxu0 0.0
    %v950 = vand.u32 %v163, 4294901760
    %v951 = vsub.f32 %v163, %v950
    %v952 = vand.u32 %v951, 4294901760
    %953 = vmatpush1.xpose.msra.mxu0 %v952
    %954 = vmatprep.subr.mxu0 0.0
    %v955 = vand.u32 %v166, 4294901760
    %v956 = vsub.f32 %v166, %v955
    %v957 = vand.u32 %v956, 4294901760
    %958 = vmatpush1.xpose.msra.mxu0 %v957
    %959 = vmatprep.subr.mxu0 0.0
    %v960 = vand.u32 %v169, 4294901760
    %v961 = vsub.f32 %v169, %v960
    %v962 = vand.u32 %v961, 4294901760
    %963 = vmatpush1.xpose.msra.mxu0 %v962
    %964 = vmatprep.subr.mxu0 0.0
    %v965 = vand.u32 %v172, 4294901760
    %v966 = vsub.f32 %v172, %v965
    %v967 = vand.u32 %v966, 4294901760
    %968 = vmatpush1.xpose.msra.mxu0 %v967
    %969 = vmatprep.subr.mxu0 0.0
    %v970 = vand.u32 %v175, 4294901760
    %v971 = vsub.f32 %v175, %v970
    %v972 = vand.u32 %v971, 4294901760
    %973 = vmatpush1.xpose.msra.mxu0 %v972
    %974 = vmatprep.subr.mxu0 0.0
    %v975 = vand.u32 %v178, 4294901760
    %v976 = vsub.f32 %v178, %v975
    %v977 = vand.u32 %v976, 4294901760
    %978 = vmatpush1.xpose.msra.mxu0 %v977
    %979 = vmatprep.subr.mxu0 0.0
    %v980 = vand.u32 %v181, 4294901760
    %v981 = vsub.f32 %v181, %v980
    %v982 = vand.u32 %v981, 4294901760
    %983 = vmatpush1.xpose.msra.mxu0 %v982
    %984 = vmatprep.subr.mxu0 0.0
    %v985 = vand.u32 %v184, 4294901760
    %v986 = vsub.f32 %v184, %v985
    %v987 = vand.u32 %v986, 4294901760
    %988 = vmatpush1.xpose.msra.mxu0 %v987
    %989 = vmatprep.subr.mxu0 0.0
    %v990 = vand.u32 %v187, 4294901760
    %v991 = vsub.f32 %v187, %v990
    %v992 = vand.u32 %v991, 4294901760
    %993 = vmatpush1.xpose.msra.mxu0 %v992
    %994 = vmatprep.subr.mxu0 0.0
    %v995 = vand.u32 %v190, 4294901760
    %v996 = vsub.f32 %v190, %v995
    %v997 = vand.u32 %v996, 4294901760
    %998 = vmatpush1.xpose.msra.mxu0 %v997
    %999 = vmatprep.subr.mxu0 0.0
    %v1000 = vand.u32 %v193, 4294901760
    %v1001 = vsub.f32 %v193, %v1000
    %v1002 = vand.u32 %v1001, 4294901760
    %1003 = vmatpush1.xpose.msra.mxu0 %v1002
    %1004 = vmatprep.subr.mxu0 0.0
    %v1005 = vand.u32 %v196, 4294901760
    %v1006 = vsub.f32 %v196, %v1005
    %v1007 = vand.u32 %v1006, 4294901760
    %1008 = vmatpush1.xpose.msra.mxu0 %v1007
    %1009 = vmatprep.subr.mxu0 0.0
    %v1010 = vand.u32 %v199, 4294901760
    %v1011 = vsub.f32 %v199, %v1010
    %v1012 = vand.u32 %v1011, 4294901760
    %1013 = vmatpush1.xpose.msra.mxu0 %v1012
    %1014 = vmatprep.mubr.f32.mxu0 0.0
    %v1015 = vand.u32 %v97, 4294901760
    %1016 = vmatmul.mubr.f32.gmra.mrb[0].mxu0 %v1015
    %v1017 = vpop.f32.mrb[0].mxu0
    %v1018 = vadd.f32 %v832, %v1017
    %v1019 = vpop.f32.mrb[0].mxu0
    %v1020 = vadd.f32 %v834, %v1019
    %1021 = vmatprep.mubr.f32.mxu0 0.0
    %v1022 = vand.u32 %v100, 4294901760
    %1023 = vmatmul.mubr.f32.gmra.mrb[0].mxu0 %v1022
    %v1024 = vpop.f32.mrb[0].mxu0
    %v1025 = vadd.f32 %v841, %v1024
    %v1026 = vpop.f32.mrb[0].mxu0
    %v1027 = vadd.f32 %v843, %v1026
    %1028 = vmatprep.mubr.f32.mxu0 0.0
    %v1029 = vand.u32 %v103, 4294901760
    %1030 = vmatmul.mubr.f32.gmra.mrb[0].mxu0 %v1029
    %v1031 = vpop.f32.mrb[0].mxu0
    %v1032 = vadd.f32 %v850, %v1031
    %v1033 = vpop.f32.mrb[0].mxu0
    %v1034 = vadd.f32 %v852, %v1033
    %1035 = vdwg.mxu0
    %1036 = vmatprep.subr.mxu0 0.0
    %v1037 = vand.u32 %v106, 4294901760
    %1038 = vmatpush1.xpose.msra.mxu0 %v1037
    %1039 = vmatprep.subr.mxu0 0.0
    %v1040 = vand.u32 %v109, 4294901760
    %1041 = vmatpush1.xpose.msra.mxu0 %v1040
    %1042 = vmatprep.subr.mxu0 0.0
    %v1043 = vand.u32 %v112, 4294901760
    %1044 = vmatpush1.xpose.msra.mxu0 %v1043
    %1045 = vmatprep.subr.mxu0 0.0
    %v1046 = vand.u32 %v115, 4294901760
    %1047 = vmatpush1.xpose.msra.mxu0 %v1046
    %1048 = vmatprep.subr.mxu0 0.0
    %v1049 = vand.u32 %v118, 4294901760
    %1050 = vmatpush1.xpose.msra.mxu0 %v1049
    %1051 = vmatprep.subr.mxu0 0.0
    %v1052 = vand.u32 %v121, 4294901760
    %1053 = vmatpush1.xpose.msra.mxu0 %v1052
    %1054 = vmatprep.subr.mxu0 0.0
    %v1055 = vand.u32 %v124, 4294901760
    %1056 = vmatpush1.xpose.msra.mxu0 %v1055
    %1057 = vmatprep.subr.mxu0 0.0
    %v1058 = vand.u32 %v127, 4294901760
    %1059 = vmatpush1.xpose.msra.mxu0 %v1058
    %1060 = vmatprep.subr.mxu0 0.0
    %v1061 = vand.u32 %v130, 4294901760
    %1062 = vmatpush1.xpose.msra.mxu0 %v1061
    %1063 = vmatprep.subr.mxu0 0.0
    %v1064 = vand.u32 %v133, 4294901760
    %1065 = vmatpush1.xpose.msra.mxu0 %v1064
    %1066 = vmatprep.subr.mxu0 0.0
    %v1067 = vand.u32 %v136, 4294901760
    %1068 = vmatpush1.xpose.msra.mxu0 %v1067
    %1069 = vmatprep.subr.mxu0 0.0
    %v1070 = vand.u32 %v139, 4294901760
    %1071 = vmatpush1.xpose.msra.mxu0 %v1070
    %1072 = vmatprep.subr.mxu0 0.0
    %v1073 = vand.u32 %v142, 4294901760
    %1074 = vmatpush1.xpose.msra.mxu0 %v1073
    %1075 = vmatprep.subr.mxu0 0.0
    %v1076 = vand.u32 %v145, 4294901760
    %1077 = vmatpush1.xpose.msra.mxu0 %v1076
    %1078 = vmatprep.subr.mxu0 0.0
    %v1079 = vand.u32 %v148, 4294901760
    %1080 = vmatpush1.xpose.msra.mxu0 %v1079
    %1081 = vmatprep.subr.mxu0 0.0
    %v1082 = vand.u32 %v151, 4294901760
    %1083 = vmatpush1.xpose.msra.mxu0 %v1082
    %1084 = vmatprep.subr.mxu0 0.0
    %v1085 = vand.u32 %v154, 4294901760
    %1086 = vmatpush1.xpose.msra.mxu0 %v1085
    %1087 = vmatprep.subr.mxu0 0.0
    %v1088 = vand.u32 %v157, 4294901760
    %1089 = vmatpush1.xpose.msra.mxu0 %v1088
    %1090 = vmatprep.subr.mxu0 0.0
    %v1091 = vand.u32 %v160, 4294901760
    %1092 = vmatpush1.xpose.msra.mxu0 %v1091
    %1093 = vmatprep.subr.mxu0 0.0
    %v1094 = vand.u32 %v163, 4294901760
    %1095 = vmatpush1.xpose.msra.mxu0 %v1094
    %1096 = vmatprep.subr.mxu0 0.0
    %v1097 = vand.u32 %v166, 4294901760
    %1098 = vmatpush1.xpose.msra.mxu0 %v1097
    %1099 = vmatprep.subr.mxu0 0.0
    %v1100 = vand.u32 %v169, 4294901760
    %1101 = vmatpush1.xpose.msra.mxu0 %v1100
    %1102 = vmatprep.subr.mxu0 0.0
    %v1103 = vand.u32 %v172, 4294901760
    %1104 = vmatpush1.xpose.msra.mxu0 %v1103
    %1105 = vmatprep.subr.mxu0 0.0
    %v1106 = vand.u32 %v175, 4294901760
    %1107 = vmatpush1.xpose.msra.mxu0 %v1106
    %1108 = vmatprep.subr.mxu0 0.0
    %v1109 = vand.u32 %v178, 4294901760
    %1110 = vmatpush1.xpose.msra.mxu0 %v1109
    %1111 = vmatprep.subr.mxu0 0.0
    %v1112 = vand.u32 %v181, 4294901760
    %1113 = vmatpush1.xpose.msra.mxu0 %v1112
    %1114 = vmatprep.subr.mxu0 0.0
    %v1115 = vand.u32 %v184, 4294901760
    %1116 = vmatpush1.xpose.msra.mxu0 %v1115
    %1117 = vmatprep.subr.mxu0 0.0
    %v1118 = vand.u32 %v187, 4294901760
    %1119 = vmatpush1.xpose.msra.mxu0 %v1118
    %1120 = vmatprep.subr.mxu0 0.0
    %v1121 = vand.u32 %v190, 4294901760
    %1122 = vmatpush1.xpose.msra.mxu0 %v1121
    %1123 = vmatprep.subr.mxu0 0.0
    %v1124 = vand.u32 %v193, 4294901760
    %1125 = vmatpush1.xpose.msra.mxu0 %v1124
    %1126 = vmatprep.subr.mxu0 0.0
    %v1127 = vand.u32 %v196, 4294901760
    %1128 = vmatpush1.xpose.msra.mxu0 %v1127
    %1129 = vmatprep.subr.mxu0 0.0
    %v1130 = vand.u32 %v199, 4294901760
    %1131 = vmatpush1.xpose.msra.mxu0 %v1130
    %1132 = vmatprep.mubr.f32.mxu0 0.0
    %v1133 = vand.u32 %v97, 4294901760
    %1134 = vmatmul.mubr.f32.gmra.mrb[0].mxu0 %v1133
    %v1135 = vpop.f32.mrb[0].mxu0
    %v1136 = vadd.f32 %v1018, %v1135
    %v1137 = vpop.f32.mrb[0].mxu0
    %v1138 = vadd.f32 %v1020, %v1137
    %1139 = vmatprep.mubr.f32.mxu0 0.0
    %v1140 = vand.u32 %v100, 4294901760
    %1141 = vmatmul.mubr.f32.gmra.mrb[0].mxu0 %v1140
    %v1142 = vpop.f32.mrb[0].mxu0
    %v1143 = vadd.f32 %v1025, %v1142
    %v1144 = vpop.f32.mrb[0].mxu0
    %v1145 = vadd.f32 %v1027, %v1144
    %1146 = vmatprep.mubr.f32.mxu0 0.0
    %v1147 = vand.u32 %v103, 4294901760
    %1148 = vmatmul.mubr.f32.gmra.mrb[0].mxu0 %v1147
    %v1149 = vpop.f32.mrb[0].mxu0
    %v1150 = vadd.f32 %v1032, %v1149
    %v1151 = vpop.f32.mrb[0].mxu0
    %v1152 = vadd.f32 %v1034, %v1151
    %1153 = vdwg.mxu0
    %1154 = vst [vmem:[%s3] sm:$0xff] %v1136
    %1155 = vst [vmem:[%s3 + $0x8] sm:$0xff] %v1138
    %1156 = vst [vmem:[%s3 + $0x10] sm:$0xff] %v1143
    %1157 = vst [vmem:[%s3 + $0x18] sm:$0xff] %v1145
    %1158 = vst [vmem:[%s3 + $0x20] sm:$0xff] %v1150
    %1159 = vst [vmem:[%s3 + $0x28] sm:$0xff] %v1152
    // Predicated region
    $region22: #{structsvm_forward.1} parent=1 // pred_check
      _
    $region23: #{structsvm_forward.1} parent=1 // pred_check_branch
      %1161 = sbr.rel (0) target = $region25
    $region24: #{structsvm_forward.1} parent=1 // pred_region
      _
    $region25: #{structsvm_forward.1} parent=1 // pred_fallthru
      _
    // Predicated region
    $region26: #{structsvm_forward.1} parent=1 // pred_check
      _
    $region27: #{structsvm_forward.1} parent=1 // pred_check_branch
      %1163 = sbr.rel (0) target = $region29
    $region28: #{structsvm_forward.1} parent=1 // pred_region
      _
    $region29: #{structsvm_forward.1} parent=1 // pred_fallthru
      _
    %1164 = vsyncpa [#allocation3], 1
    %1165 = vsyncpa [#allocation5], 1

</llo_original>
